<compile_context>
chip_gen: v7x
topology: tpu7x:2x2x1
jax: 0.10.0
libtpu: 0.0.40
codegen_flags: <defaults>
</compile_context>

<pallas_src>
import functools
import math

import jax
import jax.numpy as jnp
from jax.experimental import pallas as pl
from jax.experimental.pallas import tpu as pltpu


def _cdiv(a: int, b: int) -> int:
    return (a + b - 1) // b


def _round_up(a: int, b: int) -> int:
    return _cdiv(a, b) * b


def _fourier_kernel(x_ref, o_ref, *, num_freqs: int):
    # x_ref: (D, TN)     float32, points on the LANE axis.
    # o_ref: (D*2K, TN)  row order: [coord][sin k=0..K-1][cos k=0..K-1].
    d = x_ref.shape[0]

    # Base angles: the only transcendentals in the kernel (2*D rows total).
    t = x_ref[...] * jnp.float32(math.pi)          # (D, TN), stays f32
    s = jnp.sin(t)                                 # sin(pi*x)
    c = jnp.cos(t)                                 # cos(pi*x)

    # Angle-doubling ladder (VPU only): s_{k+1}=2*s_k*c_k, c_{k+1}=1-2*s_k^2.
    sins = [s]
    coss = [c]
    for _ in range(1, num_freqs):
        s, c = 2.0 * s * c, 1.0 - 2.0 * s * s
        sins.append(s)
        coss.append(c)

    # Assemble the full output tile in the PyTorch row order and do ONE
    # aligned (D*2K, TN) store (no 12-row misaligned slab stores).
    rows = []
    for ci in range(d):
        rows.extend(sk[ci:ci + 1, :] for sk in sins)
        rows.extend(ck[ci:ci + 1, :] for ck in coss)
    o_ref[...] = jnp.concatenate(rows, axis=0).astype(o_ref.dtype)


def fourier_embedding(x: jax.Array,
                      num_freqs: int = 6,
                      *,
                      tile_n: int = 16384,
                      out_dtype=None,
                      transposed_output: bool = False) -> jax.Array:
    """Pallas FourierEmbedding.

    Returns (..., D * 2 * num_freqs) in the PyTorch layout by default, or the
    lane-dense (D * 2 * num_freqs, N) slab if ``transposed_output=True``
    (N = prod of leading dims) -- the latter skips a full-size HBM transpose
    pass and is exactly the RHS layout the first MLP Linear wants.

    Fast path for production callers:
        fourier_embedding(x, out_dtype=jnp.bfloat16, transposed_output=True)
    (bf16 halves the dominant output-write HBM stream; compute stays f32.)

    tile_n: lane-tile upper bound. 16384 fits every generation's scoped-VMEM
    default (v5e 16 MiB); v6e/v7x callers may pass 32768.
    """
    *lead, d = x.shape
    n = 1
    for sdim in lead:
        n *= sdim
    n = max(n, 1)
    two_k = 2 * num_freqs
    out_dim = d * two_k
    out_dtype = x.dtype if out_dtype is None else out_dtype

    # Lane tile: multiple of 128, capped by tile_n, but also capped so the
    # grid keeps >= ~8 "parallel" steps (v7x has 2 TensorCores; a 1-step grid
    # leaves one idle) while still amortizing the ~0.35us per-step overhead.
    tile_cap = max(128, (int(tile_n) // 128) * 128)
    tile = min(tile_cap, max(128, _round_up(_cdiv(n, 8), 128)))
    grid = (_cdiv(n, tile),)          # ragged tail handled by a partial block

    # Input prep collapsed to one pass: points on the lane axis, f32 compute.
    xt = jnp.transpose(x.reshape(n, d).astype(jnp.float32))        # (D, N)

    yt = pl.pallas_call(
        functools.partial(_fourier_kernel, num_freqs=num_freqs),
        out_shape=jax.ShapeDtypeStruct((out_dim, n), out_dtype),
        grid_spec=pltpu.PrefetchScalarGridSpec(
            num_scalar_prefetch=0,
            grid=grid,
            in_specs=[pl.BlockSpec((d, tile), lambda i: (0, i))],
            out_specs=pl.BlockSpec((out_dim, tile), lambda i: (0, i)),
        ),
        compiler_params=pltpu.CompilerParams(
            dimension_semantics=("parallel",)),    # megacore-shardable
    )(xt)

    if transposed_output:
        return yt                                                  # (D*2K, N)
    out = jnp.transpose(yt)                                        # (N, D*2K)
    return out.reshape(*lead, out_dim)


def fourier_embedding_ref(x: jax.Array, num_freqs: int = 6) -> jax.Array:
    """Pure-JAX reference mirroring the PyTorch forward exactly."""
    freq = (2.0 ** jnp.arange(num_freqs, dtype=jnp.float32)) * jnp.pi
    e = x[..., None].astype(jnp.float32) * freq                    # (..., D, K)
    emb = jnp.concatenate([jnp.sin(e), jnp.cos(e)], axis=-1)       # (..., D, 2K)
    return emb.reshape(*x.shape[:-1], -1)                          # (..., D*2K)


if __name__ == "__main__":
    key = jax.random.PRNGKey(0)
    B, P, D, K = 2, 500, 3, 6          # N = 1000 points -> tile 128, grid=(8,), ragged tail
    x = jax.random.uniform(key, (B, P, D), dtype=jnp.float32, minval=-1.0, maxval=1.0)
    ref = fourier_embedding_ref(x, num_freqs=K)

    # Default path: PyTorch (..., 36) layout, f32 output.
    out = jax.block_until_ready(fourier_embedding(x, num_freqs=K))
    assert out.shape == (B, P, D * 2 * K), out.shape
    err = float(jnp.max(jnp.abs(out - ref)))
    assert err < 3e-4, err            # angle-doubling ladder vs direct sin/cos

    # Fast path: bf16 output, lane-dense transposed slab (no HBM transpose pass).
    yt = jax.block_until_ready(
        fourier_embedding(x, num_freqs=K, out_dtype=jnp.bfloat16,
                          transposed_output=True))
    assert yt.shape == (D * 2 * K, B * P), yt.shape
    ref_t = jnp.transpose(ref.reshape(B * P, D * 2 * K))
    err_bf16 = float(jnp.max(jnp.abs(yt.astype(jnp.float32) - ref_t)))
    assert err_bf16 < 8e-3, err_bf16

    print("KERNEL_OK")
</pallas_src>

<mosaic_0001>
module attributes {stable_mosaic.version = 11 : i64} {
  func.func @_fourier_kernel(%arg0: i32, %arg1: memref<3x128xf32, #tpu.memory_space<vmem>>, %arg2: memref<36x128xf32, #tpu.memory_space<vmem>>) attributes {dimension_semantics = [#tpu.dimension_semantics<parallel>], iteration_bounds = array<i64: 8>, scalar_prefetch = 0 : i64, scratch_operands = 0 : i64, tpu.core_type = #tpu.core_type<tc>, window_params = [{transform_indices = @transform_0, window_bounds = array<i64: 3, 128>}, {transform_indices = @transform_1, window_bounds = array<i64: 36, 128>}]} {
    %c0 = arith.constant 0 : index
    %c0_0 = arith.constant 0 : index
    %0 = vector.load %arg1[%c0, %c0_0] : memref<3x128xf32, #tpu.memory_space<vmem>>, vector<3x128xf32>
    %cst = arith.constant 3.14159274 : f32
    %1 = vector.broadcast %cst : f32 to vector<3x128xf32>
    %2 = arith.mulf %0, %1 : vector<3x128xf32>
    %3 = math.sin %2 : vector<3x128xf32>
    %4 = math.cos %2 : vector<3x128xf32>
    %cst_1 = arith.constant 2.000000e+00 : f32
    %5 = vector.broadcast %cst_1 : f32 to vector<3x128xf32>
    %6 = arith.mulf %5, %3 : vector<3x128xf32>
    %7 = arith.mulf %6, %4 : vector<3x128xf32>
    %cst_2 = arith.constant 2.000000e+00 : f32
    %8 = vector.broadcast %cst_2 : f32 to vector<3x128xf32>
    %9 = arith.mulf %8, %3 : vector<3x128xf32>
    %10 = arith.mulf %9, %3 : vector<3x128xf32>
    %cst_3 = arith.constant 1.000000e+00 : f32
    %11 = vector.broadcast %cst_3 : f32 to vector<3x128xf32>
    %12 = arith.subf %11, %10 : vector<3x128xf32>
    %cst_4 = arith.constant 2.000000e+00 : f32
    %13 = vector.broadcast %cst_4 : f32 to vector<3x128xf32>
    %14 = arith.mulf %13, %7 : vector<3x128xf32>
    %15 = arith.mulf %14, %12 : vector<3x128xf32>
    %cst_5 = arith.constant 2.000000e+00 : f32
    %16 = vector.broadcast %cst_5 : f32 to vector<3x128xf32>
    %17 = arith.mulf %16, %7 : vector<3x128xf32>
    %18 = arith.mulf %17, %7 : vector<3x128xf32>
    %cst_6 = arith.constant 1.000000e+00 : f32
    %19 = vector.broadcast %cst_6 : f32 to vector<3x128xf32>
    %20 = arith.subf %19, %18 : vector<3x128xf32>
    %cst_7 = arith.constant 2.000000e+00 : f32
    %21 = vector.broadcast %cst_7 : f32 to vector<3x128xf32>
    %22 = arith.mulf %21, %15 : vector<3x128xf32>
    %23 = arith.mulf %22, %20 : vector<3x128xf32>
    %cst_8 = arith.constant 2.000000e+00 : f32
    %24 = vector.broadcast %cst_8 : f32 to vector<3x128xf32>
    %25 = arith.mulf %24, %15 : vector<3x128xf32>
    %26 = arith.mulf %25, %15 : vector<3x128xf32>
    %cst_9 = arith.constant 1.000000e+00 : f32
    %27 = vector.broadcast %cst_9 : f32 to vector<3x128xf32>
    %28 = arith.subf %27, %26 : vector<3x128xf32>
    %cst_10 = arith.constant 2.000000e+00 : f32
    %29 = vector.broadcast %cst_10 : f32 to vector<3x128xf32>
    %30 = arith.mulf %29, %23 : vector<3x128xf32>
    %31 = arith.mulf %30, %28 : vector<3x128xf32>
    %cst_11 = arith.constant 2.000000e+00 : f32
    %32 = vector.broadcast %cst_11 : f32 to vector<3x128xf32>
    %33 = arith.mulf %32, %23 : vector<3x128xf32>
    %34 = arith.mulf %33, %23 : vector<3x128xf32>
    %cst_12 = arith.constant 1.000000e+00 : f32
    %35 = vector.broadcast %cst_12 : f32 to vector<3x128xf32>
    %36 = arith.subf %35, %34 : vector<3x128xf32>
    %cst_13 = arith.constant 2.000000e+00 : f32
    %37 = vector.broadcast %cst_13 : f32 to vector<3x128xf32>
    %38 = arith.mulf %37, %31 : vector<3x128xf32>
    %39 = arith.mulf %38, %36 : vector<3x128xf32>
    %cst_14 = arith.constant 2.000000e+00 : f32
    %40 = vector.broadcast %cst_14 : f32 to vector<3x128xf32>
    %41 = arith.mulf %40, %31 : vector<3x128xf32>
    %42 = arith.mulf %41, %31 : vector<3x128xf32>
    %cst_15 = arith.constant 1.000000e+00 : f32
    %43 = vector.broadcast %cst_15 : f32 to vector<3x128xf32>
    %44 = arith.subf %43, %42 : vector<3x128xf32>
    %45 = vector.extract_strided_slice %3 {offsets = [0, 0], sizes = [1, 128], strides = [1, 1]} : vector<3x128xf32> to vector<1x128xf32>
    %46 = vector.extract_strided_slice %7 {offsets = [0, 0], sizes = [1, 128], strides = [1, 1]} : vector<3x128xf32> to vector<1x128xf32>
    %47 = vector.extract_strided_slice %15 {offsets = [0, 0], sizes = [1, 128], strides = [1, 1]} : vector<3x128xf32> to vector<1x128xf32>
    %48 = vector.extract_strided_slice %23 {offsets = [0, 0], sizes = [1, 128], strides = [1, 1]} : vector<3x128xf32> to vector<1x128xf32>
    %49 = vector.extract_strided_slice %31 {offsets = [0, 0], sizes = [1, 128], strides = [1, 1]} : vector<3x128xf32> to vector<1x128xf32>
    %50 = vector.extract_strided_slice %39 {offsets = [0, 0], sizes = [1, 128], strides = [1, 1]} : vector<3x128xf32> to vector<1x128xf32>
    %51 = vector.extract_strided_slice %4 {offsets = [0, 0], sizes = [1, 128], strides = [1, 1]} : vector<3x128xf32> to vector<1x128xf32>
    %52 = vector.extract_strided_slice %12 {offsets = [0, 0], sizes = [1, 128], strides = [1, 1]} : vector<3x128xf32> to vector<1x128xf32>
    %53 = vector.extract_strided_slice %20 {offsets = [0, 0], sizes = [1, 128], strides = [1, 1]} : vector<3x128xf32> to vector<1x128xf32>
    %54 = vector.extract_strided_slice %28 {offsets = [0, 0], sizes = [1, 128], strides = [1, 1]} : vector<3x128xf32> to vector<1x128xf32>
    %55 = vector.extract_strided_slice %36 {offsets = [0, 0], sizes = [1, 128], strides = [1, 1]} : vector<3x128xf32> to vector<1x128xf32>
    %56 = vector.extract_strided_slice %44 {offsets = [0, 0], sizes = [1, 128], strides = [1, 1]} : vector<3x128xf32> to vector<1x128xf32>
    %57 = vector.extract_strided_slice %3 {offsets = [1, 0], sizes = [1, 128], strides = [1, 1]} : vector<3x128xf32> to vector<1x128xf32>
    %58 = vector.extract_strided_slice %7 {offsets = [1, 0], sizes = [1, 128], strides = [1, 1]} : vector<3x128xf32> to vector<1x128xf32>
    %59 = vector.extract_strided_slice %15 {offsets = [1, 0], sizes = [1, 128], strides = [1, 1]} : vector<3x128xf32> to vector<1x128xf32>
    %60 = vector.extract_strided_slice %23 {offsets = [1, 0], sizes = [1, 128], strides = [1, 1]} : vector<3x128xf32> to vector<1x128xf32>
    %61 = vector.extract_strided_slice %31 {offsets = [1, 0], sizes = [1, 128], strides = [1, 1]} : vector<3x128xf32> to vector<1x128xf32>
    %62 = vector.extract_strided_slice %39 {offsets = [1, 0], sizes = [1, 128], strides = [1, 1]} : vector<3x128xf32> to vector<1x128xf32>
    %63 = vector.extract_strided_slice %4 {offsets = [1, 0], sizes = [1, 128], strides = [1, 1]} : vector<3x128xf32> to vector<1x128xf32>
    %64 = vector.extract_strided_slice %12 {offsets = [1, 0], sizes = [1, 128], strides = [1, 1]} : vector<3x128xf32> to vector<1x128xf32>
    %65 = vector.extract_strided_slice %20 {offsets = [1, 0], sizes = [1, 128], strides = [1, 1]} : vector<3x128xf32> to vector<1x128xf32>
    %66 = vector.extract_strided_slice %28 {offsets = [1, 0], sizes = [1, 128], strides = [1, 1]} : vector<3x128xf32> to vector<1x128xf32>
    %67 = vector.extract_strided_slice %36 {offsets = [1, 0], sizes = [1, 128], strides = [1, 1]} : vector<3x128xf32> to vector<1x128xf32>
    %68 = vector.extract_strided_slice %44 {offsets = [1, 0], sizes = [1, 128], strides = [1, 1]} : vector<3x128xf32> to vector<1x128xf32>
    %69 = vector.extract_strided_slice %3 {offsets = [2, 0], sizes = [1, 128], strides = [1, 1]} : vector<3x128xf32> to vector<1x128xf32>
    %70 = vector.extract_strided_slice %7 {offsets = [2, 0], sizes = [1, 128], strides = [1, 1]} : vector<3x128xf32> to vector<1x128xf32>
    %71 = vector.extract_strided_slice %15 {offsets = [2, 0], sizes = [1, 128], strides = [1, 1]} : vector<3x128xf32> to vector<1x128xf32>
    %72 = vector.extract_strided_slice %23 {offsets = [2, 0], sizes = [1, 128], strides = [1, 1]} : vector<3x128xf32> to vector<1x128xf32>
    %73 = vector.extract_strided_slice %31 {offsets = [2, 0], sizes = [1, 128], strides = [1, 1]} : vector<3x128xf32> to vector<1x128xf32>
    %74 = vector.extract_strided_slice %39 {offsets = [2, 0], sizes = [1, 128], strides = [1, 1]} : vector<3x128xf32> to vector<1x128xf32>
    %75 = vector.extract_strided_slice %4 {offsets = [2, 0], sizes = [1, 128], strides = [1, 1]} : vector<3x128xf32> to vector<1x128xf32>
    %76 = vector.extract_strided_slice %12 {offsets = [2, 0], sizes = [1, 128], strides = [1, 1]} : vector<3x128xf32> to vector<1x128xf32>
    %77 = vector.extract_strided_slice %20 {offsets = [2, 0], sizes = [1, 128], strides = [1, 1]} : vector<3x128xf32> to vector<1x128xf32>
    %78 = vector.extract_strided_slice %28 {offsets = [2, 0], sizes = [1, 128], strides = [1, 1]} : vector<3x128xf32> to vector<1x128xf32>
    %79 = vector.extract_strided_slice %36 {offsets = [2, 0], sizes = [1, 128], strides = [1, 1]} : vector<3x128xf32> to vector<1x128xf32>
    %80 = vector.extract_strided_slice %44 {offsets = [2, 0], sizes = [1, 128], strides = [1, 1]} : vector<3x128xf32> to vector<1x128xf32>
    %81 = tpu.concatenate %45, %46, %47, %48, %49, %50, %51, %52, %53, %54, %55, %56, %57, %58, %59, %60 in 0 : vector<1x128xf32>, vector<1x128xf32>, vector<1x128xf32>, vector<1x128xf32>, vector<1x128xf32>, vector<1x128xf32>, vector<1x128xf32>, vector<1x128xf32>, vector<1x128xf32>, vector<1x128xf32>, vector<1x128xf32>, vector<1x128xf32>, vector<1x128xf32>, vector<1x128xf32>, vector<1x128xf32>, vector<1x128xf32> -> vector<16x128xf32>
    %82 = tpu.concatenate %61, %62, %63, %64, %65, %66, %67, %68, %69, %70, %71, %72, %73, %74, %75, %76 in 0 : vector<1x128xf32>, vector<1x128xf32>, vector<1x128xf32>, vector<1x128xf32>, vector<1x128xf32>, vector<1x128xf32>, vector<1x128xf32>, vector<1x128xf32>, vector<1x128xf32>, vector<1x128xf32>, vector<1x128xf32>, vector<1x128xf32>, vector<1x128xf32>, vector<1x128xf32>, vector<1x128xf32>, vector<1x128xf32> -> vector<16x128xf32>
    %83 = tpu.concatenate %77, %78, %79, %80 in 0 : vector<1x128xf32>, vector<1x128xf32>, vector<1x128xf32>, vector<1x128xf32> -> vector<4x128xf32>
    %84 = tpu.concatenate %81, %82, %83 in 0 : vector<16x128xf32>, vector<16x128xf32>, vector<4x128xf32> -> vector<36x128xf32>
    %c0_16 = arith.constant 0 : index
    %c0_17 = arith.constant 0 : index
    %85 = vector.load %arg2[%c0_16, %c0_17] : memref<36x128xf32, #tpu.memory_space<vmem>>, vector<36x128xf32>
    tpu.vector_store %arg2[%c0_16, %c0_17], %84 {strides = array<i32>} : memref<36x128xf32, #tpu.memory_space<vmem>>, vector<36x128xf32>,
    return
  }
  func.func @transform_0(%arg0: i32) -> (i32, i32) {
    %c0_i32 = arith.constant 0 : i32
    %c0_i32_0 = arith.constant 0 : i32
    return %c0_i32, %arg0 : i32, i32
  }
  func.func @transform_1(%arg0: i32) -> (i32, i32) {
    %c0_i32 = arith.constant 0 : i32
    %c0_i32_0 = arith.constant 0 : i32
    return %c0_i32, %arg0 : i32, i32
  }
}

</mosaic_0001>

<llo_original>
// kernel: tpu_custom_call.1
$region0: #{tpu_custom_call.1}
  #allocation0 [shape = 'u32[]', space=smem, size = 0x4, offset = 0x4, fixed_abs, tag = 'smem constant byte address 0x4 - core index']
  #allocation1 [shape = 'u32[144,128]{1,0:T(1,128)}', space=vmem, size = 0x12000, scoped, tag = 'internal scratch']
  %s0 = inlined_call_operand.hbm [shape: f32[3,1000], index: 0, kind: input, shape index: {}]
  %s1 = inlined_call_operand.hbm [shape: f32[36,1000], index: 1, kind: output, shape index: {}]
  %s2 = sld [smem:[#allocation0]]
  $region41: #{tpu_custom_call.1} parent=0
    _
  %s4 = ssub.s32 1, %s2
  %s5 = scalar_select 0, %s4, %s2
  $region1: #{tpu_custom_call.1} parent=0
    #allocation2 [shape = 'u8[4096]{0}', space=vmem, size = 0x1000, scoped, tag = 'input window, operand 0']
    #allocation3 [shape = 's32[2]{0}', space=sflag, size = 0x8, scoped, tag = 'scoped memory for tpu_custom_call.1']
    #allocation4 [shape = 's32[2]{0}', space=sflag, size = 0x8, scoped, tag = 'scoped memory for tpu_custom_call.1']
    #allocation5 [shape = 'u8[40960]{0}', space=vmem, size = 0xa000, scoped, tag = 'output window, operand 0']
    %6 = vsyncpa [#allocation3], 0
    %s7 = scalar_lea.sflag [#allocation3], 1
    %8 = vsyncpa %s7, 0
    %9 = vsyncpa [#allocation4], 0
    %s10 = scalar_lea.sflag [#allocation4], 1
    %11 = vsyncpa %s10, 0
    loop: start=0, step=1, limit=10
    $region2: #{tpu_custom_call.1} parent=1 // loop_pre_header
      _
    $region3: #{tpu_custom_call.1} parent=1 // loop_header
      %s13 = sphi 0, %s17
      %p14 = scmp.ge.s32.totalorder %s13, 10
      %s23 = sphi 0, %s25
      %s26 = sphi 0, %s23
      %s27 = sphi 0, %s26
      %s43 = sphi 0, %s27
      %s49 = sphi 0, %s51
      %s52 = sphi 0, %s49
      %s53 = sphi 0, %s52
      %s69 = sphi 0, %s53
    $region4: #{tpu_custom_call.1} parent=1 // loop_header_branch
      %16 = sbr.rel (%p14) target = $region8
    $region5: #{tpu_custom_call.1} parent=1 // loop_body
      %s18 = ssub.s32 %s13, 1
      %s19 = ssub.s32 %s13, 2
      %s20 = sadd.s32 %s13, 1
      %s21 = ssub.s32 %s13, %s20
      %p22 = scmp.eq.s32.totalorder %s21, 0
      %s24 = sadd.s32 %s23, 1
      %s25 = scalar_select %p22, %s23, %s24
      %p28 = pneg %p22
      %p29 = scmp.eq.s32.totalorder %s13, 7
      %p30 = por %p28, %p29
      %p31 = scmp.ne.s32.totalorder %s23, %s26
      %p32 = scmp.eq.s32.totalorder %s13, 0
      %p33 = por %p31, %p32
      %p34 = scmp.ne.s32.totalorder %s23, %s26
      %p35 = scmp.eq.s32.totalorder %s18, 7
      %p36 = por %p34, %p35
      %p37 = scmp.ne.s32.totalorder %s26, %s27
      %p38 = scmp.eq.s32.totalorder %s18, 0
      %p39 = por %p37, %p38
      %p40 = scmp.ne.s32.totalorder %s26, %s27
      %p41 = scmp.eq.s32.totalorder %s19, 7
      %p42 = por %p40, %p41
      %p44 = scmp.ne.s32.totalorder %s27, %s43
      %p45 = scmp.eq.s32.totalorder %s19, 0
      %p46 = por %p44, %p45
      %s47 = ssub.s32 %s13, %s20
      %p48 = scmp.eq.s32.totalorder %s47, 0
      %s50 = sadd.s32 %s49, 1
      %s51 = scalar_select %p48, %s49, %s50
      %p54 = pneg %p48
      %p55 = scmp.eq.s32.totalorder %s13, 7
      %p56 = por %p54, %p55
      %p57 = scmp.ne.s32.totalorder %s49, %s52
      %p58 = scmp.eq.s32.totalorder %s13, 0
      %p59 = por %p57, %p58
      %p60 = scmp.ne.s32.totalorder %s49, %s52
      %p61 = scmp.eq.s32.totalorder %s18, 7
      %p62 = por %p60, %p61
      %p63 = scmp.ne.s32.totalorder %s52, %s53
      %p64 = scmp.eq.s32.totalorder %s18, 0
      %p65 = por %p63, %p64
      %p66 = scmp.ne.s32.totalorder %s52, %s53
      %p67 = scmp.eq.s32.totalorder %s19, 7
      %p68 = por %p66, %p67
      %p70 = scmp.ne.s32.totalorder %s53, %s69
      %p71 = scmp.eq.s32.totalorder %s19, 0
      %p72 = por %p70, %p71
      %p73 = scmp.le.s32.totalorder 1, %s13
      %p74 = scmp.lt.s32.totalorder %s13, 9
      %p75 = pnand %p73, %p74
      %p76 = pneg %p75
      // Predicated region
      $region9: #{tpu_custom_call.1} parent=5 // pred_check
        _
      $region10: #{tpu_custom_call.1} parent=5 // pred_check_branch
        %78 = sbr.rel (%p75) target = $region12
      $region11: #{tpu_custom_call.1} parent=5 // pred_region
        %s79 = ssub.s32 %s13, 1
      $region12: #{tpu_custom_call.1} parent=5 // pred_fallthru
        _
      %p80 = scmp.lt.s32.totalorder %s13, 8
      // Predicated region
      $region13: #{tpu_custom_call.1} parent=5 // pred_check
        %p81 = pneg %p80
      $region14: #{tpu_custom_call.1} parent=5 // pred_check_branch
        %83 = sbr.rel (%p81) target = $region16
      $region15: #{tpu_custom_call.1} parent=5 // pred_region
        // Predicated region
        $region17: #{tpu_custom_call.1} parent=15 // pred_check
          %p84 = pneg %p33
        $region18: #{tpu_custom_call.1} parent=15 // pred_check_branch
          %86 = sbr.rel (%p84) target = $region20
        $region19: #{tpu_custom_call.1} parent=15 // pred_region
          %s87 = sand.u32 %s23, 1
          %s88 = scalar_lea.sflag [#allocation3], %s87
          %s89 = sand.u32 %s23, 1
          %s90 = smul.addr %s89, 4
          %s91 = scalar_lea.vmem [#allocation2], %s90
          %s93 = ssub.s32 64, 64
          %94 = vsyncadd %s88, %s93
          %s95 = smul.addr %s13, 64
          %s96 = scalar_lea.hbm %s0, %s95
          %s98 = sshll.u32 %s91, 4
          %s99 = int_to_ptr.vmem [resolvable:$true] %s98
          %101 = dma.hbm_to_vmem [thread:$0]  %s96, 64, %s99, %s88
        $region20: #{tpu_custom_call.1} parent=15 // pred_fallthru
          _
      $region16: #{tpu_custom_call.1} parent=5 // pred_fallthru
        _
      %p102 = scmp.le.s32.totalorder 1, %s13
      %p103 = scmp.lt.s32.totalorder %s13, 9
      %p104 = pnand %p102, %p103
      %p105 = pneg %p104
      // Predicated region
      $region21: #{tpu_custom_call.1} parent=5 // pred_check
        _
      $region22: #{tpu_custom_call.1} parent=5 // pred_check_branch
        %107 = sbr.rel (%p104) target = $region24
      $region23: #{tpu_custom_call.1} parent=5 // pred_region
        %s108 = ssub.s32 %s13, 1
        %s109 = sand.u32 %s26, 1
        %s110 = scalar_lea.sflag [#allocation3], %s109
        %s111 = sand.u32 %s26, 1
        %s112 = smul.addr %s111, 4
        %s113 = scalar_lea.vmem [#allocation2], %s112
        // Predicated region
        $region25: #{tpu_custom_call.1} parent=23 // pred_check
          %p114 = pneg %p39
        $region26: #{tpu_custom_call.1} parent=23 // pred_check_branch
          %116 = sbr.rel (%p114) target = $region28
        $region27: #{tpu_custom_call.1} parent=23 // pred_region
          %117 = dma.done %s110, 64
        $region28: #{tpu_custom_call.1} parent=23 // pred_fallthru
          _
        %s118 = sand.u32 %s26, 1
        %s119 = scalar_lea.sflag [#allocation3], %s118
        %s120 = sand.u32 %s26, 1
        %s121 = smul.addr %s120, 4
        %s122 = scalar_lea.vmem [#allocation2], %s121
        %p123 = pneg %p39
        %p124 = pneg %p36
        %p125 = pneg %p65
        %p126 = pneg %p62
        %s127 = sand.u32 %s52, 1
        %s128 = scalar_lea.sflag [#allocation4], %s127
        %s129 = sand.u32 %s52, 1
        %s130 = smul.addr %s129, 40
        %s131 = scalar_lea.vmem [#allocation5], %s130
        %v132 = vld [vmem:[%s113] sm:$0x7]
        %v133 = vmul.f32 %v132, 3.1415927
        %v134 = vand.u32 2147483647, %v133
        %vm135 = vcmp.le.f32.partialorder %v134, 0.7853982
        %vm136 = vcmp.lt.s32.totalorder %v133, 0
        %v137 = vand.u32 %v133, 2139095040
        %v138 = vshrl.u32 %v137, 23
        %v139 = vsub.s32 %v138, 127
        %v140 = vand.u32 2147483647, %v133
        %v141 = vand.u32 %v140, 8388607
        %v142 = vor.u32 %v141, 8388608
        %v143 = vsub.s32 0, %v142
        %v144 = vadd.s32 %v139, 1
        %vm145 = vcmp.gt.s32.totalorder %v144, 0
        %v146 = vsel %vm145, %v144, 0
        %v147 = vshrl.u32 %v146, 5
        %v148 = vand.u32 %v146, 31
        %v149 = vsub.s32 32, %v148
        %v150 = vshrl.u32 683565275, %v149
        %v151 = vshll.u32 683565275, %v148
        %v152 = vshrl.u32 2475754826, %v149
        %v153 = vor.u32 %v151, %v152
        %v154 = vshll.u32 2475754826, %v148
        %v155 = vshrl.u32 2131351028, %v149
        %v156 = vor.u32 %v154, %v155
        %v157 = vshll.u32 2131351028, %v148
        %v158 = vshrl.u32 2102212464, %v149
        %v159 = vor.u32 %v157, %v158
        %v160 = vshll.u32 2102212464, %v148
        %v161 = vshrl.u32 920167782, %v149
        %v162 = vor.u32 %v160, %v161
        %v163 = vshll.u32 920167782, %v148
        %v164 = vshrl.u32 1326507024, %v149
        %v165 = vor.u32 %v163, %v164
        %vm166 = vcmp.lt.s32.totalorder %v147, 1
        %vm167 = vcmp.lt.s32.totalorder %v147, 2
        %vm168 = vcmp.lt.s32.totalorder %v147, 3
        %vm169 = vcmp.lt.s32.totalorder %v147, 4
        %v170 = vsel %vm166, %v150, %v153
        %v171 = vsel %vm169, %v159, 2102212464
        %v172 = vsel %vm168, %v156, %v171
        %v173 = vsel %vm167, %v170, %v172
        %v174 = vsel %vm166, %v153, %v156
        %v175 = vsel %vm169, %v162, 920167782
        %v176 = vsel %vm168, %v159, %v175
        %v177 = vsel %vm167, %v174, %v176
        %v178 = vsel %vm166, %v156, %v159
        %v179 = vsel %vm169, %v165, 1326507024
        %v180 = vsel %vm168, %v162, %v179
        %v181 = vsel %vm167, %v178, %v180
        %v182 = vshll.u32 %v142, 8
        %v183 = vmul.u32.u64.compose %v182, %v181
        %v184 = vextract.low.u32 %v183
        %v185 = vextract.high.u32 %v183
        %v186 = vmul.u32.u64.compose %v182, %v177
        %v187 = vextract.low.u32 %v186
        %v188 = vextract.high.u32 %v186
        %v189 = vmul.u32 %v182, %v173
        %v190 = vadd.s32 %v185, %v187
        %vm191 = vc.u32 %v185, %v187
        %v192 = vadd.s32 %v188, 1
        %v193 = vsel %vm191, %v192, %v188
        %v194 = vadd.s32 %v189, %v193
        %v195 = vadd.s32 %v194, 536870912
        %v196 = vshrl.u32 %v195, 30
        %v197 = vshll.u32 %v196, 30
        %v198 = vsub.s32 %v194, %v197
        %vm199 = vcmp.lt.s32.totalorder %v198, 0
        %v200 = vsub.s32 0, %v198
        %v201 = vsel %vm199, %v200, %v198
        %v202 = vclz %v201
        %v203 = vsub.s32 %v202, 2
        %vm204 = vcmp.gt.s32.totalorder 0, %v203
        %v205 = vsel %vm204, 0, %v203
        %v206 = vsub.s32 32, %v205
        %v207 = vshll.u32 %v198, %v205
        %v208 = vshrl.u32 %v190, %v206
        %v209 = vor.u32 %v207, %v208
        %v210 = vsub.s32 4294967266, %v205
        %v211 = vadd.s32 %v210, 127
        %v212 = vshll.u32 %v211, 23
        %v213 = vor.u32 4788187, %v212
        %v214 = vand.u32 2147483647, %v213
        %v216 = vcvt.s32.f32 %v209
        %v217 = vmul.f32 %v216, %v214
        %v218 = vxor.u32 %v217, 2147483648
        %v219 = vsel %vm136, %v218, %v217
        %v220 = vsub.s32 4, %v196
        %v221 = vsel %vm136, %v220, %v196
        %v222 = vsel %vm135, %v133, %v219
        %v223 = vsel %vm135, 0, %v221
        %v224 = vcosq.f32.pop %v222
        %v225 = vsinq.f32.pop %v222
        %vm226 = vweird.f32 %v133
        %v227 = vadd.s32 %v223, 3
        %v228 = vand.u32 %v227, 3
        %vm229 = vcmp.lt.s32.totalorder %v228, 2
        %vm230 = vcmp.eq.s32.totalorder %v228, 0
        %v231 = vxor.u32 %v225, 2147483648
        %v232 = vsel %vm230, %v224, %v231
        %vm233 = vcmp.eq.s32.totalorder %v228, 2
        %v234 = vxor.u32 %v224, 2147483648
        %v235 = vsel %vm233, %v234, %v225
        %v236 = vsel %vm229, %v232, %v235
        %v237 = vsel %vm226, nan, %v236
        %v238 = vand.u32 2147483647, %v133
        %vm239 = vcmp.le.f32.partialorder %v238, 0.7853982
        %vm240 = vcmp.lt.s32.totalorder %v133, 0
        %v241 = vand.u32 %v133, 2139095040
        %v242 = vshrl.u32 %v241, 23
        %v243 = vsub.s32 %v242, 127
        %v244 = vand.u32 2147483647, %v133
        %v245 = vand.u32 %v244, 8388607
        %v246 = vor.u32 %v245, 8388608
        %v247 = vsub.s32 0, %v246
        %v248 = vadd.s32 %v243, 1
        %vm249 = vcmp.gt.s32.totalorder %v248, 0
        %v250 = vsel %vm249, %v248, 0
        %v251 = vshrl.u32 %v250, 5
        %v252 = vand.u32 %v250, 31
        %v253 = vsub.s32 32, %v252
        %v254 = vshrl.u32 683565275, %v253
        %v255 = vshll.u32 683565275, %v252
        %v256 = vshrl.u32 2475754826, %v253
        %v257 = vor.u32 %v255, %v256
        %v258 = vshll.u32 2475754826, %v252
        %v259 = vshrl.u32 2131351028, %v253
        %v260 = vor.u32 %v258, %v259
        %v261 = vshll.u32 2131351028, %v252
        %v262 = vshrl.u32 2102212464, %v253
        %v263 = vor.u32 %v261, %v262
        %v264 = vshll.u32 2102212464, %v252
        %v265 = vshrl.u32 920167782, %v253
        %v266 = vor.u32 %v264, %v265
        %v267 = vshll.u32 920167782, %v252
        %v268 = vshrl.u32 1326507024, %v253
        %v269 = vor.u32 %v267, %v268
        %vm270 = vcmp.lt.s32.totalorder %v251, 1
        %vm271 = vcmp.lt.s32.totalorder %v251, 2
        %vm272 = vcmp.lt.s32.totalorder %v251, 3
        %vm273 = vcmp.lt.s32.totalorder %v251, 4
        %v274 = vsel %vm270, %v254, %v257
        %v275 = vsel %vm273, %v263, 2102212464
        %v276 = vsel %vm272, %v260, %v275
        %v277 = vsel %vm271, %v274, %v276
        %v278 = vsel %vm270, %v257, %v260
        %v279 = vsel %vm273, %v266, 920167782
        %v280 = vsel %vm272, %v263, %v279
        %v281 = vsel %vm271, %v278, %v280
        %v282 = vsel %vm270, %v260, %v263
        %v283 = vsel %vm273, %v269, 1326507024
        %v284 = vsel %vm272, %v266, %v283
        %v285 = vsel %vm271, %v282, %v284
        %v286 = vshll.u32 %v246, 8
        %v287 = vmul.u32.u64.compose %v286, %v285
        %v288 = vextract.low.u32 %v287
        %v289 = vextract.high.u32 %v287
        %v290 = vmul.u32.u64.compose %v286, %v281
        %v291 = vextract.low.u32 %v290
        %v292 = vextract.high.u32 %v290
        %v293 = vmul.u32 %v286, %v277
        %v294 = vadd.s32 %v289, %v291
        %vm295 = vc.u32 %v289, %v291
        %v296 = vadd.s32 %v292, 1
        %v297 = vsel %vm295, %v296, %v292
        %v298 = vadd.s32 %v293, %v297
        %v299 = vadd.s32 %v298, 536870912
        %v300 = vshrl.u32 %v299, 30
        %v301 = vshll.u32 %v300, 30
        %v302 = vsub.s32 %v298, %v301
        %vm303 = vcmp.lt.s32.totalorder %v302, 0
        %v304 = vsub.s32 0, %v302
        %v305 = vsel %vm303, %v304, %v302
        %v306 = vclz %v305
        %v307 = vsub.s32 %v306, 2
        %vm308 = vcmp.gt.s32.totalorder 0, %v307
        %v309 = vsel %vm308, 0, %v307
        %v310 = vsub.s32 32, %v309
        %v311 = vshll.u32 %v302, %v309
        %v312 = vshrl.u32 %v294, %v310
        %v313 = vor.u32 %v311, %v312
        %v314 = vsub.s32 4294967266, %v309
        %v315 = vadd.s32 %v314, 127
        %v316 = vshll.u32 %v315, 23
        %v317 = vor.u32 4788187, %v316
        %v318 = vand.u32 2147483647, %v317
        %v320 = vcvt.s32.f32 %v313
        %v321 = vmul.f32 %v320, %v318
        %v322 = vxor.u32 %v321, 2147483648
        %v323 = vsel %vm240, %v322, %v321
        %v324 = vsub.s32 4, %v300
        %v325 = vsel %vm240, %v324, %v300
        %v326 = vsel %vm239, %v133, %v323
        %v327 = vsel %vm239, 0, %v325
        %v328 = vcosq.f32.pop %v326
        %v329 = vsinq.f32.pop %v326
        %vm330 = vweird.f32 %v133
        %v331 = vand.u32 %v327, 3
        %vm332 = vcmp.lt.s32.totalorder %v331, 2
        %vm333 = vcmp.eq.s32.totalorder %v331, 0
        %v334 = vxor.u32 %v329, 2147483648
        %v335 = vsel %vm333, %v328, %v334
        %vm336 = vcmp.eq.s32.totalorder %v331, 2
        %v337 = vxor.u32 %v328, 2147483648
        %v338 = vsel %vm336, %v337, %v329
        %v339 = vsel %vm332, %v335, %v338
        %v340 = vsel %vm330, nan, %v339
        %v341 = vmul.f32 %v237, 2.0
        %v342 = vmul.f32 %v341, %v340
        %v343 = vmul.f32 %v341, %v237
        %v344 = vsub.f32 1.0, %v343
        %v345 = vmul.f32 %v342, 2.0
        %v346 = vmul.f32 %v345, %v344
        %v347 = vmul.f32 %v345, %v342
        %v348 = vsub.f32 1.0, %v347
        %v349 = vmul.f32 %v346, 2.0
        %v350 = vmul.f32 %v349, %v348
        %v351 = vmul.f32 %v349, %v346
        %v352 = vsub.f32 1.0, %v351
        %v353 = vmul.f32 %v350, 2.0
        %v354 = vmul.f32 %v353, %v352
        %v355 = vmul.f32 %v353, %v350
        %v356 = vsub.f32 1.0, %v355
        %v357 = vmul.f32 %v354, 2.0
        %v358 = vmul.f32 %v357, %v356
        %v359 = vmul.f32 %v357, %v354
        %v360 = vsub.f32 1.0, %v359
        %v362 = vrot.slane %v342, 7
        %v365 = vrot.slane %v346, 6
        %v368 = vrot.slane %v350, 5
        %v371 = vrot.slane %v354, 4
        %v374 = vrot.slane %v358, 3
        %v377 = vrot.slane %v340, 2
        %v380 = vrot.slane %v344, 1
        %v383 = vrot.slane %v352, 7
        %v386 = vrot.slane %v356, 6
        %v389 = vrot.slane %v360, 5
        %v392 = vrot.slane %v237, 5
        %v394 = vrot.slane %v342, 4
        %v396 = vrot.slane %v346, 3
        %v398 = vrot.slane %v350, 2
        %vm400 = vcmask 1040384
        %v401 = vsel %vm400, %v237, %v362
        %vm402 = vcmask 1041408
        %v403 = vsel %vm402, %v401, %v365
        %vm404 = vcmask 1042432
        %v405 = vsel %vm404, %v403, %v368
        %vm406 = vcmask 1043456
        %v407 = vsel %vm406, %v405, %v371
        %vm408 = vcmask 1044480
        %v409 = vsel %vm408, %v407, %v374
        %vm410 = vcmask 1045504
        %v411 = vsel %vm410, %v409, %v377
        %vm412 = vcmask 1046528
        %v413 = vsel %vm412, %v411, %v380
        %v414 = vsel %vm400, %v348, %v383
        %v415 = vsel %vm402, %v414, %v386
        %v416 = vsel %vm404, %v415, %v389
        %v417 = vsel %vm406, %v416, %v392
        %v418 = vsel %vm408, %v417, %v394
        %v419 = vsel %vm410, %v418, %v396
        %v420 = vsel %vm412, %v419, %v398
        %v421 = vrot.slane %v354, 1
        %v423 = vrot.slane %v340, 7
        %v425 = vrot.slane %v344, 6
        %v428 = vrot.slane %v348, 5
        %v430 = vrot.slane %v352, 4
        %v432 = vrot.slane %v356, 3
        %v434 = vrot.slane %v360, 2
        %v436 = vrot.slane %v237, 2
        %v438 = vrot.slane %v342, 1
        %v440 = vrot.slane %v350, 7
        %v442 = vrot.slane %v354, 6
        %v444 = vrot.slane %v358, 5
        %v446 = vrot.slane %v340, 4
        %v448 = vrot.slane %v344, 3
        %v450 = vsel %vm400, %v421, %v358
        %v451 = vsel %vm402, %v450, %v423
        %v452 = vsel %vm404, %v451, %v425
        %v453 = vsel %vm406, %v452, %v428
        %v454 = vsel %vm408, %v453, %v430
        %v455 = vsel %vm410, %v454, %v432
        %v456 = vsel %vm412, %v455, %v434
        %v457 = vsel %vm400, %v436, %v438
        %v458 = vsel %vm402, %v457, %v346
        %v459 = vsel %vm404, %v458, %v440
        %v460 = vsel %vm406, %v459, %v442
        %v461 = vsel %vm408, %v460, %v444
        %v462 = vsel %vm410, %v461, %v446
        %v463 = vsel %vm412, %v462, %v448
        %v464 = vrot.slane %v348, 2
        %v466 = vrot.slane %v352, 1
        %v468 = vrot.slane %v360, 7
        %v470 = vsel %vm400, %v464, %v466
        %v471 = vsel %vm402, %v470, %v356
        %v472 = vsel %vm404, %v471, %v468
        %473 = vst [vmem:[%s131] sm:$0xff] %v413
        %474 = vst [vmem:[%s131 + $0x8] sm:$0xff] %v420
        %475 = vst [vmem:[%s131 + $0x10] sm:$0xff] %v456
        %476 = vst [vmem:[%s131 + $0x18] sm:$0xff] %v463
        %477 = vst [vmem:[%s131 + $0x20] sm:$0xf] %v472
        %s478 = sand.u32 %s52, 1
        %s479 = scalar_lea.sflag [#allocation4], %s478
        %s480 = sand.u32 %s52, 1
        %s481 = smul.addr %s480, 40
        %s482 = scalar_lea.vmem [#allocation5], %s481
        // Predicated region
        $region29: #{tpu_custom_call.1} parent=23 // pred_check
          %p483 = pneg %p62
        $region30: #{tpu_custom_call.1} parent=23 // pred_check_branch
          %485 = sbr.rel (%p483) target = $region32
        $region31: #{tpu_custom_call.1} parent=23 // pred_region
          %s487 = ssub.s32 640, 640
          %488 = vsyncadd %s479, %s487
          %s489 = smul.addr %s18, 128
          %s490 = scalar_lea.hbm %s1, %s489
          %s491 = sshll.u32 %s482, 4
          %s492 = int_to_ptr.vmem [resolvable:$true] %s491
          %497 = dma.vmem_to_hbm [thread:$0]  %s492, 640, %s490, %s479, 128, 1024, 8
        $region32: #{tpu_custom_call.1} parent=23 // pred_fallthru
          _
      $region24: #{tpu_custom_call.1} parent=5 // pred_fallthru
        _
      %p498 = scmp.le.s32.totalorder 2, %s13
      // Predicated region
      $region33: #{tpu_custom_call.1} parent=5 // pred_check
        %p499 = pneg %p498
      $region34: #{tpu_custom_call.1} parent=5 // pred_check_branch
        %501 = sbr.rel (%p499) target = $region36
      $region35: #{tpu_custom_call.1} parent=5 // pred_region
        %s502 = ssub.s32 %s13, 2
        // Predicated region
        $region37: #{tpu_custom_call.1} parent=35 // pred_check
          %p503 = pneg %p68
        $region38: #{tpu_custom_call.1} parent=35 // pred_check_branch
          %505 = sbr.rel (%p503) target = $region40
        $region39: #{tpu_custom_call.1} parent=35 // pred_region
          %s506 = sand.u32 %s53, 1
          %s507 = scalar_lea.sflag [#allocation4], %s506
          %s508 = sand.u32 %s53, 1
          %s509 = smul.addr %s508, 40
          %s510 = scalar_lea.vmem [#allocation5], %s509
          %511 = dma.done %s507, 640
        $region40: #{tpu_custom_call.1} parent=35 // pred_fallthru
          _
      $region36: #{tpu_custom_call.1} parent=5 // pred_fallthru
        _
    $region6: #{tpu_custom_call.1} parent=1 // loop_footer
      %s17 = sadd.s32 1, %s13
    $region7: #{tpu_custom_call.1} parent=1 // loop_footer_branch
      %12 = sbr.rel target = $region3
    $region8: #{tpu_custom_call.1} parent=1 // loop_exit
      _
    %512 = vsyncpa [#allocation3], 1
    %s513 = scalar_lea.sflag [#allocation3], 1
    %514 = vsyncpa %s513, 1
    %515 = vsyncpa [#allocation4], 1
    %s516 = scalar_lea.sflag [#allocation4], 1
    %517 = vsyncpa %s516, 1

</llo_original>
